<compile_context>
chip_gen: v6e
topology: v6e:2x2x1
jax: 0.10.0
libtpu: 0.0.40
codegen_flags: <defaults>
</compile_context>

<pallas_src>
import jax
import jax.numpy as jnp
import numpy as np
from jax.experimental import pallas as pl
from jax.experimental.pallas import tpu as pltpu


MID_CHANNELS = 120   # hard-coded in the PyTorch module
LANE = 128           # TPU lane width
ROW_ALIGN = 16       # bf16 packs 16 rows per vreg


def _round_up(n, m):
    return ((n + m - 1) // m) * m


def lenet_output_block_kernel(x_ref, w1_ref, b1_ref, w2_ref, b2_ref,
                              w3_ref, b3_ref, o_ref):
    # Per-tile f32 -> bf16 cast on the VPU (kernel is HBM-bound; this rides idle slots).
    x = x_ref[...].astype(w1_ref.dtype)
    # fc1 + ReLU  (bf16 operands -> MXU, f32 accumulate; bias add / ReLU in f32)
    h1 = jnp.dot(x, w1_ref[...], preferred_element_type=jnp.float32)
    h1 = jnp.maximum(h1 + b1_ref[...], 0.0)
    # fc2 + ReLU
    h2 = jnp.dot(h1.astype(w2_ref.dtype), w2_ref[...],
                 preferred_element_type=jnp.float32)
    h2 = jnp.maximum(h2 + b2_ref[...], 0.0)
    # fc3 (no activation)
    out = jnp.dot(h2.astype(w3_ref.dtype), w3_ref[...],
                  preferred_element_type=jnp.float32)
    o_ref[...] = (out + b3_ref[...]).astype(o_ref.dtype)


def lenet_output_block(x, packed, *, classes, tile_m=1024, out_dtype=jnp.float32):
    """x: (B, in_features) float32.  packed: lane-padded/casted params from pack_params()."""
    w1, b1, w2, b2, w3, b3 = (packed["w1"], packed["b1"], packed["w2"],
                              packed["b2"], packed["w3"], packed["b3"])
    B, in_features = x.shape
    assert w1.shape[0] == in_features
    mid_pad = w1.shape[1]
    out_pad = w3.shape[1]

    # Batch tile: as large as possible to amortize per-grid-step overhead, but
    #   - rounded to 16-row alignment (bf16 sublane packing; also guards odd tile_m),
    #   - capped at ~B/2 so the grid keeps >= 2 steps and v7x megacore can shard
    #     the "parallel" batch axis (no-op on single-TC v5e/v6e).
    # No batch padding: the ragged last tile's OOB reads only affect output rows
    # that are dropped on writeback (each output row depends only on its own input row).
    tm = min(_round_up(tile_m, ROW_ALIGN),
             _round_up(max(pl.cdiv(B, 2), ROW_ALIGN), ROW_ALIGN))
    grid = (pl.cdiv(B, tm),)

    flops = 2 * B * (in_features * mid_pad + mid_pad * mid_pad + mid_pad * out_pad)
    bytes_accessed = (
        x.size * x.dtype.itemsize
        + sum(a.size * a.dtype.itemsize for a in (w1, b1, w2, b2, w3, b3))
        + B * out_pad * np.dtype(out_dtype).itemsize)

    out = pl.pallas_call(
        lenet_output_block_kernel,
        out_shape=jax.ShapeDtypeStruct((B, out_pad), out_dtype),
        grid=grid,
        in_specs=[
            pl.BlockSpec((tm, in_features), lambda i: (i, 0)),       # x: streamed per tile
            pl.BlockSpec((in_features, mid_pad), lambda i: (0, 0)),  # weights: VMEM-resident
            pl.BlockSpec((1, mid_pad), lambda i: (0, 0)),
            pl.BlockSpec((mid_pad, mid_pad), lambda i: (0, 0)),
            pl.BlockSpec((1, mid_pad), lambda i: (0, 0)),
            pl.BlockSpec((mid_pad, out_pad), lambda i: (0, 0)),
            pl.BlockSpec((1, out_pad), lambda i: (0, 0)),
        ],
        out_specs=pl.BlockSpec((tm, out_pad), lambda i: (i, 0)),
        compiler_params=pltpu.CompilerParams(
            dimension_semantics=("parallel",)),
        cost_estimate=pl.CostEstimate(flops=flops, transcendentals=0,
                                      bytes_accessed=bytes_accessed),
    )(x, w1, b1, w2, b2, w3, b3)

    return out[:, :classes]


def init_params(key, in_channels, classes):
    """Unpadded f32 params; init mimics PyTorch nn.Linear (uniform +-1/sqrt(fan_in))."""
    def linear(k, fan_in, fan_out):
        kw, kb = jax.random.split(k)
        bound = 1.0 / jnp.sqrt(jnp.float32(fan_in))
        w = jax.random.uniform(kw, (fan_in, fan_out), jnp.float32, -bound, bound)
        b = jax.random.uniform(kb, (1, fan_out), jnp.float32, -bound, bound)
        return w, b

    k1, k2, k3 = jax.random.split(key, 3)
    w1, b1 = linear(k1, in_channels, MID_CHANNELS)
    w2, b2 = linear(k2, MID_CHANNELS, MID_CHANNELS)
    w3, b3 = linear(k3, MID_CHANNELS, classes)
    return dict(w1=w1, b1=b1, w2=w2, b2=b2, w3=w3, b3=b3)


def pack_params(params, *, compute_dtype=jnp.bfloat16):
    """Zero-pad output (lane) dims to multiples of 128 and cast weights to bf16.

    Row dims stay at their natural size: w1 keeps in_features rows (full-dim blocks
    are always legal), w2/w3 take 128 rows to match the padded hidden activation.
    """
    def pad2(a, rows, cols):
        return jnp.zeros((rows, cols), a.dtype).at[:a.shape[0], :a.shape[1]].set(a)

    in_features, mid = params["w1"].shape
    classes = params["w3"].shape[1]
    mid_pad = _round_up(mid, LANE)
    out_pad = _round_up(classes, LANE)

    return dict(
        w1=pad2(params["w1"], in_features, mid_pad).astype(compute_dtype),
        b1=pad2(params["b1"], 1, mid_pad),                       # biases stay f32
        w2=pad2(params["w2"], mid_pad, mid_pad).astype(compute_dtype),
        b2=pad2(params["b2"], 1, mid_pad),
        w3=pad2(params["w3"], mid_pad, out_pad).astype(compute_dtype),
        b3=pad2(params["b3"], 1, out_pad),
    )


def reference(x, p, compute_dtype=jnp.float32):
    cd = compute_dtype
    h1 = jnp.dot(x.astype(cd), p["w1"].astype(cd),
                 preferred_element_type=jnp.float32) + p["b1"]
    h1 = jnp.maximum(h1, 0.0)
    h2 = jnp.dot(h1.astype(cd), p["w2"].astype(cd),
                 preferred_element_type=jnp.float32) + p["b2"]
    h2 = jnp.maximum(h2, 0.0)
    return jnp.dot(h2.astype(cd), p["w3"].astype(cd),
                   preferred_element_type=jnp.float32) + p["b3"]


if __name__ == "__main__":
    key = jax.random.PRNGKey(0)
    k_x, k_p = jax.random.split(key)

    # B=50 exercises a 2-step grid (tm=32) with a ragged last tile (no batch padding).
    B = 50
    in_channels = 256
    classes = 10

    x = jax.random.normal(k_x, (B, in_channels), jnp.float32)
    params = init_params(k_p, in_channels, classes)
    packed = pack_params(params, compute_dtype=jnp.bfloat16)

    out = lenet_output_block(x, packed, classes=classes)
    out = jax.block_until_ready(out)

    ref_bf16 = reference(x, params, compute_dtype=jnp.bfloat16)  # same numerics as kernel
    ref_f32 = reference(x, params, compute_dtype=jnp.float32)    # loose sanity check

    assert out.shape == (B, classes)
    assert jnp.allclose(out, ref_bf16, atol=1e-3, rtol=1e-3), "mismatch vs bf16 reference"
    assert jnp.allclose(out, ref_f32, atol=5e-2, rtol=5e-2), "mismatch vs f32 reference"

    print("KERNEL_OK")
</pallas_src>

<mosaic_0001>
module attributes {stable_mosaic.version = 11 : i64} {
  func.func @lenet_output_block_kernel(%arg0: i32, %arg1: memref<32x256xf32, #tpu.memory_space<vmem>>, %arg2: memref<256x128xbf16, #tpu.memory_space<vmem>>, %arg3: memref<1x128xf32, #tpu.memory_space<vmem>>, %arg4: memref<128x128xbf16, #tpu.memory_space<vmem>>, %arg5: memref<1x128xf32, #tpu.memory_space<vmem>>, %arg6: memref<128x128xbf16, #tpu.memory_space<vmem>>, %arg7: memref<1x128xf32, #tpu.memory_space<vmem>>, %arg8: memref<32x128xf32, #tpu.memory_space<vmem>>) attributes {dimension_semantics = [#tpu.dimension_semantics<parallel>], iteration_bounds = array<i64: 2>, scalar_prefetch = 0 : i64, scratch_operands = 0 : i64, tpu.core_type = #tpu.core_type<tc>, window_params = [{transform_indices = @transform_0, window_bounds = array<i64: 32, 256>}, {pipeline_mode = #tpu.pipeline_mode<synchronous>, transform_indices = @transform_1, window_bounds = array<i64: 256, 128>}, {pipeline_mode = #tpu.pipeline_mode<synchronous>, transform_indices = @transform_2, window_bounds = array<i64: 1, 128>}, {pipeline_mode = #tpu.pipeline_mode<synchronous>, transform_indices = @transform_3, window_bounds = array<i64: 128, 128>}, {pipeline_mode = #tpu.pipeline_mode<synchronous>, transform_indices = @transform_4, window_bounds = array<i64: 1, 128>}, {pipeline_mode = #tpu.pipeline_mode<synchronous>, transform_indices = @transform_5, window_bounds = array<i64: 128, 128>}, {pipeline_mode = #tpu.pipeline_mode<synchronous>, transform_indices = @transform_6, window_bounds = array<i64: 1, 128>}, {transform_indices = @transform_7, window_bounds = array<i64: 32, 128>}]} {
    %c0 = arith.constant 0 : index
    %c0_0 = arith.constant 0 : index
    %0 = vector.load %arg1[%c0, %c0_0] : memref<32x256xf32, #tpu.memory_space<vmem>>, vector<32x256xf32>
    %1 = arith.truncf %0 : vector<32x256xf32> to vector<32x256xbf16>
    %c0_1 = arith.constant 0 : index
    %c0_2 = arith.constant 0 : index
    %2 = vector.load %arg2[%c0_1, %c0_2] : memref<256x128xbf16, #tpu.memory_space<vmem>>, vector<256x128xbf16>
    %cst = arith.constant dense<0.000000e+00> : vector<32x128xf32>
    %3 = tpu.matmul %1, %2, %cst {dimension_numbers = #tpu.dot_dimension_numbers<[1], [0], [0], [1], [0, 0, 1, 1], [], []>} : vector<32x256xbf16>, vector<256x128xbf16>, vector<32x128xf32> -> vector<32x128xf32>
    %c0_3 = arith.constant 0 : index
    %c0_4 = arith.constant 0 : index
    %4 = vector.load %arg3[%c0_3, %c0_4] : memref<1x128xf32, #tpu.memory_space<vmem>>, vector<1x128xf32>
    %5 = vector.broadcast %4 : vector<1x128xf32> to vector<32x128xf32>
    %6 = arith.addf %3, %5 : vector<32x128xf32>
    %cst_5 = arith.constant 0.000000e+00 : f32
    %7 = vector.broadcast %cst_5 : f32 to vector<32x128xf32>
    %8 = arith.maximumf %6, %7 : vector<32x128xf32>
    %9 = arith.truncf %8 : vector<32x128xf32> to vector<32x128xbf16>
    %c0_6 = arith.constant 0 : index
    %c0_7 = arith.constant 0 : index
    %10 = vector.load %arg4[%c0_6, %c0_7] : memref<128x128xbf16, #tpu.memory_space<vmem>>, vector<128x128xbf16>
    %cst_8 = arith.constant dense<0.000000e+00> : vector<32x128xf32>
    %11 = tpu.matmul %9, %10, %cst_8 {dimension_numbers = #tpu.dot_dimension_numbers<[1], [0], [0], [1], [0, 0, 1, 1], [], []>} : vector<32x128xbf16>, vector<128x128xbf16>, vector<32x128xf32> -> vector<32x128xf32>
    %c0_9 = arith.constant 0 : index
    %c0_10 = arith.constant 0 : index
    %12 = vector.load %arg5[%c0_9, %c0_10] : memref<1x128xf32, #tpu.memory_space<vmem>>, vector<1x128xf32>
    %13 = vector.broadcast %12 : vector<1x128xf32> to vector<32x128xf32>
    %14 = arith.addf %11, %13 : vector<32x128xf32>
    %cst_11 = arith.constant 0.000000e+00 : f32
    %15 = vector.broadcast %cst_11 : f32 to vector<32x128xf32>
    %16 = arith.maximumf %14, %15 : vector<32x128xf32>
    %17 = arith.truncf %16 : vector<32x128xf32> to vector<32x128xbf16>
    %c0_12 = arith.constant 0 : index
    %c0_13 = arith.constant 0 : index
    %18 = vector.load %arg6[%c0_12, %c0_13] : memref<128x128xbf16, #tpu.memory_space<vmem>>, vector<128x128xbf16>
    %cst_14 = arith.constant dense<0.000000e+00> : vector<32x128xf32>
    %19 = tpu.matmul %17, %18, %cst_14 {dimension_numbers = #tpu.dot_dimension_numbers<[1], [0], [0], [1], [0, 0, 1, 1], [], []>} : vector<32x128xbf16>, vector<128x128xbf16>, vector<32x128xf32> -> vector<32x128xf32>
    %c0_15 = arith.constant 0 : index
    %c0_16 = arith.constant 0 : index
    %20 = vector.load %arg7[%c0_15, %c0_16] : memref<1x128xf32, #tpu.memory_space<vmem>>, vector<1x128xf32>
    %21 = vector.broadcast %20 : vector<1x128xf32> to vector<32x128xf32>
    %22 = arith.addf %19, %21 : vector<32x128xf32>
    %c0_17 = arith.constant 0 : index
    %c0_18 = arith.constant 0 : index
    %23 = vector.load %arg8[%c0_17, %c0_18] : memref<32x128xf32, #tpu.memory_space<vmem>>, vector<32x128xf32>
    tpu.vector_store %arg8[%c0_17, %c0_18], %22 {strides = array<i32>} : memref<32x128xf32, #tpu.memory_space<vmem>>, vector<32x128xf32>,
    return
  }
  func.func @transform_0(%arg0: i32) -> (i32, i32) {
    %c0_i32 = arith.constant 0 : i32
    %c0_i32_0 = arith.constant 0 : i32
    return %arg0, %c0_i32 : i32, i32
  }
  func.func @transform_1(%arg0: i32) -> (i32, i32) {
    %c0_i32 = arith.constant 0 : i32
    %c0_i32_0 = arith.constant 0 : i32
    %c0_i32_1 = arith.constant 0 : i32
    return %c0_i32, %c0_i32_0 : i32, i32
  }
  func.func @transform_2(%arg0: i32) -> (i32, i32) {
    %c0_i32 = arith.constant 0 : i32
    %c0_i32_0 = arith.constant 0 : i32
    %c0_i32_1 = arith.constant 0 : i32
    return %c0_i32, %c0_i32_0 : i32, i32
  }
  func.func @transform_3(%arg0: i32) -> (i32, i32) {
    %c0_i32 = arith.constant 0 : i32
    %c0_i32_0 = arith.constant 0 : i32
    %c0_i32_1 = arith.constant 0 : i32
    return %c0_i32, %c0_i32_0 : i32, i32
  }
  func.func @transform_4(%arg0: i32) -> (i32, i32) {
    %c0_i32 = arith.constant 0 : i32
    %c0_i32_0 = arith.constant 0 : i32
    %c0_i32_1 = arith.constant 0 : i32
    return %c0_i32, %c0_i32_0 : i32, i32
  }
  func.func @transform_5(%arg0: i32) -> (i32, i32) {
    %c0_i32 = arith.constant 0 : i32
    %c0_i32_0 = arith.constant 0 : i32
    %c0_i32_1 = arith.constant 0 : i32
    return %c0_i32, %c0_i32_0 : i32, i32
  }
  func.func @transform_6(%arg0: i32) -> (i32, i32) {
    %c0_i32 = arith.constant 0 : i32
    %c0_i32_0 = arith.constant 0 : i32
    %c0_i32_1 = arith.constant 0 : i32
    return %c0_i32, %c0_i32_0 : i32, i32
  }
  func.func @transform_7(%arg0: i32) -> (i32, i32) {
    %c0_i32 = arith.constant 0 : i32
    %c0_i32_0 = arith.constant 0 : i32
    return %arg0, %c0_i32 : i32, i32
  }
}

</mosaic_0001>

<llo_original>
// kernel: tpu_custom_call.1
$region0: #{tpu_custom_call.1}
  #allocation0 [shape = 'u32[]', space=smem, size = 0x4, offset = 0x4, fixed_abs, tag = 'smem constant byte address 0x4 - core index']
  #allocation1 [shape = 'u32[144,128]{1,0:T(1,128)}', space=vmem, size = 0x12000, scoped, tag = 'internal scratch']
  %s0 = inlined_call_operand.hbm [shape: f32[50,256], index: 0, kind: input, shape index: {}]
  %s1 = inlined_call_operand.hbm [shape: bf16[256,128], index: 1, kind: input, shape index: {}]
  %s2 = inlined_call_operand.vmem [shape: f32[1,128], index: 2, kind: input, shape index: {}]
  %s3 = inlined_call_operand.hbm [shape: bf16[128,128], index: 3, kind: input, shape index: {}]
  %s4 = inlined_call_operand.vmem [shape: f32[1,128], index: 4, kind: input, shape index: {}]
  %s5 = inlined_call_operand.hbm [shape: bf16[128,128], index: 5, kind: input, shape index: {}]
  %s6 = inlined_call_operand.vmem [shape: f32[1,128], index: 6, kind: input, shape index: {}]
  %s7 = inlined_call_operand.hbm [shape: f32[50,128], index: 7, kind: output, shape index: {}]
  %s8 = sld [smem:[#allocation0]]
  $region77: #{tpu_custom_call.1} parent=0
    _
  %s10 = ssub.s32 1, %s8
  %s11 = scalar_select 0, %s10, %s8
  $region1: #{tpu_custom_call.1} parent=0
    #allocation2 [shape = 'u8[65536]{0}', space=vmem, size = 0x10000, scoped, tag = 'input window, operand 0']
    #allocation3 [shape = 's32[2]{0}', space=sflag, size = 0x8, scoped, tag = 'scoped memory for tpu_custom_call.1']
    #allocation4 [shape = 's32[2]{0}', space=sflag, size = 0x8, scoped, tag = 'scoped memory for tpu_custom_call.1']
    #allocation5 [shape = 'u8[65536]{0}', space=vmem, size = 0x10000, scoped, tag = 'input window, operand 1, single buffered']
    #allocation6 [shape = 's32[1]{0}', space=sflag, size = 0x4, scoped, tag = 'scoped memory for tpu_custom_call.1']
    #allocation7 [shape = 'u8[32768]{0}', space=vmem, size = 0x8000, scoped, tag = 'input window, operand 3, single buffered']
    #allocation8 [shape = 'u8[32768]{0}', space=vmem, size = 0x8000, scoped, tag = 'input window, operand 5, single buffered']
    #allocation9 [shape = 's32[1]{0}', space=sflag, size = 0x4, scoped, tag = 'scoped memory for tpu_custom_call.1']
    #allocation10 [shape = 'u8[32768]{0}', space=vmem, size = 0x8000, scoped, tag = 'output window, operand 0']
    %12 = vsyncpa [#allocation3], 0
    %s13 = scalar_lea.sflag [#allocation3], 1
    %14 = vsyncpa %s13, 0
    %15 = vsyncpa [#allocation6], 0
    %16 = vsyncpa [#allocation9], 0
    %17 = vsyncpa [#allocation4], 0
    %s18 = scalar_lea.sflag [#allocation4], 1
    %19 = vsyncpa %s18, 0
    loop: start=0, step=1, limit=4
    $region2: #{tpu_custom_call.1} parent=1 // loop_pre_header
      _
    $region3: #{tpu_custom_call.1} parent=1 // loop_header
      %s21 = sphi 0, %s25
      %p22 = scmp.ge.s32.totalorder %s21, 4
      %s31 = sphi 0, %s33
      %s34 = sphi 0, %s31
      %s35 = sphi 0, %s34
      %s51 = sphi 0, %s35
      %s55 = sphi 0, %s55
      %s57 = sphi 0, %s55
      %s58 = sphi 0, %s57
      %s72 = sphi 0, %s58
      %s76 = sphi 0, %s76
      %s78 = sphi 0, %s76
      %s79 = sphi 0, %s78
      %s93 = sphi 0, %s79
      %s97 = sphi 0, %s97
      %s99 = sphi 0, %s97
      %s100 = sphi 0, %s99
      %s114 = sphi 0, %s100
      %s118 = sphi 0, %s118
      %s120 = sphi 0, %s118
      %s121 = sphi 0, %s120
      %s135 = sphi 0, %s121
      %s139 = sphi 0, %s139
      %s141 = sphi 0, %s139
      %s142 = sphi 0, %s141
      %s156 = sphi 0, %s142
      %s160 = sphi 0, %s160
      %s162 = sphi 0, %s160
      %s163 = sphi 0, %s162
      %s177 = sphi 0, %s163
      %s183 = sphi 0, %s185
      %s186 = sphi 0, %s183
      %s187 = sphi 0, %s186
      %s203 = sphi 0, %s187
    $region4: #{tpu_custom_call.1} parent=1 // loop_header_branch
      %24 = sbr.rel (%p22) target = $region8
    $region5: #{tpu_custom_call.1} parent=1 // loop_body
      %s26 = ssub.s32 %s21, 1
      %s27 = ssub.s32 %s21, 2
      %s28 = sadd.s32 %s21, 1
      %s29 = ssub.s32 %s21, %s28
      %p30 = scmp.eq.s32.totalorder %s29, 0
      %s32 = sadd.s32 %s31, 1
      %s33 = scalar_select %p30, %s31, %s32
      %p36 = pneg %p30
      %p37 = scmp.eq.s32.totalorder %s21, 1
      %p38 = por %p36, %p37
      %p39 = scmp.ne.s32.totalorder %s31, %s34
      %p40 = scmp.eq.s32.totalorder %s21, 0
      %p41 = por %p39, %p40
      %p42 = scmp.ne.s32.totalorder %s31, %s34
      %p43 = scmp.eq.s32.totalorder %s26, 1
      %p44 = por %p42, %p43
      %p45 = scmp.ne.s32.totalorder %s34, %s35
      %p46 = scmp.eq.s32.totalorder %s26, 0
      %p47 = por %p45, %p46
      %p48 = scmp.ne.s32.totalorder %s34, %s35
      %p49 = scmp.eq.s32.totalorder %s27, 1
      %p50 = por %p48, %p49
      %p52 = scmp.ne.s32.totalorder %s35, %s51
      %p53 = scmp.eq.s32.totalorder %s27, 0
      %p54 = por %p52, %p53
      %s56 = sadd.s32 %s55, 1
      %p59 = scmp.eq.s32.totalorder %s21, 1
      %p60 = scmp.ne.s32.totalorder %s55, %s57
      %p61 = scmp.eq.s32.totalorder %s21, 0
      %p62 = por %p60, %p61
      %p63 = scmp.ne.s32.totalorder %s55, %s57
      %p64 = scmp.eq.s32.totalorder %s26, 1
      %p65 = por %p63, %p64
      %p66 = scmp.ne.s32.totalorder %s57, %s58
      %p67 = scmp.eq.s32.totalorder %s26, 0
      %p68 = por %p66, %p67
      %p69 = scmp.ne.s32.totalorder %s57, %s58
      %p70 = scmp.eq.s32.totalorder %s27, 1
      %p71 = por %p69, %p70
      %p73 = scmp.ne.s32.totalorder %s58, %s72
      %p74 = scmp.eq.s32.totalorder %s27, 0
      %p75 = por %p73, %p74
      %s77 = sadd.s32 %s76, 1
      %p80 = scmp.eq.s32.totalorder %s21, 1
      %p81 = scmp.ne.s32.totalorder %s76, %s78
      %p82 = scmp.eq.s32.totalorder %s21, 0
      %p83 = por %p81, %p82
      %p84 = scmp.ne.s32.totalorder %s76, %s78
      %p85 = scmp.eq.s32.totalorder %s26, 1
      %p86 = por %p84, %p85
      %p87 = scmp.ne.s32.totalorder %s78, %s79
      %p88 = scmp.eq.s32.totalorder %s26, 0
      %p89 = por %p87, %p88
      %p90 = scmp.ne.s32.totalorder %s78, %s79
      %p91 = scmp.eq.s32.totalorder %s27, 1
      %p92 = por %p90, %p91
      %p94 = scmp.ne.s32.totalorder %s79, %s93
      %p95 = scmp.eq.s32.totalorder %s27, 0
      %p96 = por %p94, %p95
      %s98 = sadd.s32 %s97, 1
      %p101 = scmp.eq.s32.totalorder %s21, 1
      %p102 = scmp.ne.s32.totalorder %s97, %s99
      %p103 = scmp.eq.s32.totalorder %s21, 0
      %p104 = por %p102, %p103
      %p105 = scmp.ne.s32.totalorder %s97, %s99
      %p106 = scmp.eq.s32.totalorder %s26, 1
      %p107 = por %p105, %p106
      %p108 = scmp.ne.s32.totalorder %s99, %s100
      %p109 = scmp.eq.s32.totalorder %s26, 0
      %p110 = por %p108, %p109
      %p111 = scmp.ne.s32.totalorder %s99, %s100
      %p112 = scmp.eq.s32.totalorder %s27, 1
      %p113 = por %p111, %p112
      %p115 = scmp.ne.s32.totalorder %s100, %s114
      %p116 = scmp.eq.s32.totalorder %s27, 0
      %p117 = por %p115, %p116
      %s119 = sadd.s32 %s118, 1
      %p122 = scmp.eq.s32.totalorder %s21, 1
      %p123 = scmp.ne.s32.totalorder %s118, %s120
      %p124 = scmp.eq.s32.totalorder %s21, 0
      %p125 = por %p123, %p124
      %p126 = scmp.ne.s32.totalorder %s118, %s120
      %p127 = scmp.eq.s32.totalorder %s26, 1
      %p128 = por %p126, %p127
      %p129 = scmp.ne.s32.totalorder %s120, %s121
      %p130 = scmp.eq.s32.totalorder %s26, 0
      %p131 = por %p129, %p130
      %p132 = scmp.ne.s32.totalorder %s120, %s121
      %p133 = scmp.eq.s32.totalorder %s27, 1
      %p134 = por %p132, %p133
      %p136 = scmp.ne.s32.totalorder %s121, %s135
      %p137 = scmp.eq.s32.totalorder %s27, 0
      %p138 = por %p136, %p137
      %s140 = sadd.s32 %s139, 1
      %p143 = scmp.eq.s32.totalorder %s21, 1
      %p144 = scmp.ne.s32.totalorder %s139, %s141
      %p145 = scmp.eq.s32.totalorder %s21, 0
      %p146 = por %p144, %p145
      %p147 = scmp.ne.s32.totalorder %s139, %s141
      %p148 = scmp.eq.s32.totalorder %s26, 1
      %p149 = por %p147, %p148
      %p150 = scmp.ne.s32.totalorder %s141, %s142
      %p151 = scmp.eq.s32.totalorder %s26, 0
      %p152 = por %p150, %p151
      %p153 = scmp.ne.s32.totalorder %s141, %s142
      %p154 = scmp.eq.s32.totalorder %s27, 1
      %p155 = por %p153, %p154
      %p157 = scmp.ne.s32.totalorder %s142, %s156
      %p158 = scmp.eq.s32.totalorder %s27, 0
      %p159 = por %p157, %p158
      %s161 = sadd.s32 %s160, 1
      %p164 = scmp.eq.s32.totalorder %s21, 1
      %p165 = scmp.ne.s32.totalorder %s160, %s162
      %p166 = scmp.eq.s32.totalorder %s21, 0
      %p167 = por %p165, %p166
      %p168 = scmp.ne.s32.totalorder %s160, %s162
      %p169 = scmp.eq.s32.totalorder %s26, 1
      %p170 = por %p168, %p169
      %p171 = scmp.ne.s32.totalorder %s162, %s163
      %p172 = scmp.eq.s32.totalorder %s26, 0
      %p173 = por %p171, %p172
      %p174 = scmp.ne.s32.totalorder %s162, %s163
      %p175 = scmp.eq.s32.totalorder %s27, 1
      %p176 = por %p174, %p175
      %p178 = scmp.ne.s32.totalorder %s163, %s177
      %p179 = scmp.eq.s32.totalorder %s27, 0
      %p180 = por %p178, %p179
      %s181 = ssub.s32 %s21, %s28
      %p182 = scmp.eq.s32.totalorder %s181, 0
      %s184 = sadd.s32 %s183, 1
      %s185 = scalar_select %p182, %s183, %s184
      %p188 = pneg %p182
      %p189 = scmp.eq.s32.totalorder %s21, 1
      %p190 = por %p188, %p189
      %p191 = scmp.ne.s32.totalorder %s183, %s186
      %p192 = scmp.eq.s32.totalorder %s21, 0
      %p193 = por %p191, %p192
      %p194 = scmp.ne.s32.totalorder %s183, %s186
      %p195 = scmp.eq.s32.totalorder %s26, 1
      %p196 = por %p194, %p195
      %p197 = scmp.ne.s32.totalorder %s186, %s187
      %p198 = scmp.eq.s32.totalorder %s26, 0
      %p199 = por %p197, %p198
      %p200 = scmp.ne.s32.totalorder %s186, %s187
      %p201 = scmp.eq.s32.totalorder %s27, 1
      %p202 = por %p200, %p201
      %p204 = scmp.ne.s32.totalorder %s187, %s203
      %p205 = scmp.eq.s32.totalorder %s27, 0
      %p206 = por %p204, %p205
      %p207 = scmp.le.s32.totalorder 1, %s21
      %p208 = scmp.lt.s32.totalorder %s21, 3
      %p209 = pnand %p207, %p208
      %p210 = pneg %p209
      // Predicated region
      $region9: #{tpu_custom_call.1} parent=5 // pred_check
        _
      $region10: #{tpu_custom_call.1} parent=5 // pred_check_branch
        %212 = sbr.rel (%p209) target = $region12
      $region11: #{tpu_custom_call.1} parent=5 // pred_region
        %s213 = ssub.s32 %s21, 1
        // Predicated region
        $region13: #{tpu_custom_call.1} parent=11 // pred_check
          %p214 = pneg %p68
        $region14: #{tpu_custom_call.1} parent=11 // pred_check_branch
          %216 = sbr.rel (%p214) target = $region16
        $region15: #{tpu_custom_call.1} parent=11 // pred_region
          %s218 = ssub.s32 2048, 2048
          %219 = vsyncadd [#allocation6], %s218
          %s220 = sshll.u32 [#allocation5], 4
          %s221 = int_to_ptr.vmem [resolvable:$true] %s220
          %226 = dma.hbm_to_vmem [thread:$0]  %s1, 2048, %s221, [#allocation6], 64, 64, 4
        $region16: #{tpu_custom_call.1} parent=11 // pred_fallthru
          _
        // Predicated region
        $region17: #{tpu_custom_call.1} parent=11 // pred_check
          %p227 = pneg %p89
        $region18: #{tpu_custom_call.1} parent=11 // pred_check_branch
          %229 = sbr.rel (%p227) target = $region20
        $region19: #{tpu_custom_call.1} parent=11 // pred_region
          _
        $region20: #{tpu_custom_call.1} parent=11 // pred_fallthru
          _
        // Predicated region
        $region21: #{tpu_custom_call.1} parent=11 // pred_check
          %p230 = pneg %p110
        $region22: #{tpu_custom_call.1} parent=11 // pred_check_branch
          %232 = sbr.rel (%p230) target = $region24
        $region23: #{tpu_custom_call.1} parent=11 // pred_region
          %s234 = ssub.s32 1024, 1024
          %235 = vsyncadd [#allocation6], %s234
          %s236 = sshll.u32 [#allocation7], 4
          %s237 = int_to_ptr.vmem [resolvable:$true] %s236
          %242 = dma.hbm_to_vmem [thread:$0]  %s3, 1024, %s237, [#allocation6], 64, 64, 4
        $region24: #{tpu_custom_call.1} parent=11 // pred_fallthru
          _
        // Predicated region
        $region25: #{tpu_custom_call.1} parent=11 // pred_check
          %p243 = pneg %p131
        $region26: #{tpu_custom_call.1} parent=11 // pred_check_branch
          %245 = sbr.rel (%p243) target = $region28
        $region27: #{tpu_custom_call.1} parent=11 // pred_region
          _
        $region28: #{tpu_custom_call.1} parent=11 // pred_fallthru
          _
        // Predicated region
        $region29: #{tpu_custom_call.1} parent=11 // pred_check
          %p246 = pneg %p152
        $region30: #{tpu_custom_call.1} parent=11 // pred_check_branch
          %248 = sbr.rel (%p246) target = $region32
        $region31: #{tpu_custom_call.1} parent=11 // pred_region
          %s250 = ssub.s32 1024, 1024
          %251 = vsyncadd [#allocation9], %s250
          %s252 = sshll.u32 [#allocation8], 4
          %s253 = int_to_ptr.vmem [resolvable:$true] %s252
          %258 = dma.hbm_to_vmem [thread:$0]  %s5, 1024, %s253, [#allocation9], 64, 64, 4
        $region32: #{tpu_custom_call.1} parent=11 // pred_fallthru
          _
        // Predicated region
        $region33: #{tpu_custom_call.1} parent=11 // pred_check
          %p259 = pneg %p173
        $region34: #{tpu_custom_call.1} parent=11 // pred_check_branch
          %261 = sbr.rel (%p259) target = $region36
        $region35: #{tpu_custom_call.1} parent=11 // pred_region
          _
        $region36: #{tpu_custom_call.1} parent=11 // pred_fallthru
          _
      $region12: #{tpu_custom_call.1} parent=5 // pred_fallthru
        _
      %p262 = scmp.lt.s32.totalorder %s21, 2
      // Predicated region
      $region37: #{tpu_custom_call.1} parent=5 // pred_check
        %p263 = pneg %p262
      $region38: #{tpu_custom_call.1} parent=5 // pred_check_branch
        %265 = sbr.rel (%p263) target = $region40
      $region39: #{tpu_custom_call.1} parent=5 // pred_region
        // Predicated region
        $region41: #{tpu_custom_call.1} parent=39 // pred_check
          %p266 = pneg %p41
        $region42: #{tpu_custom_call.1} parent=39 // pred_check_branch
          %268 = sbr.rel (%p266) target = $region44
        $region43: #{tpu_custom_call.1} parent=39 // pred_region
          %s269 = sand.u32 %s31, 1
          %s270 = scalar_lea.sflag [#allocation3], %s269
          %s271 = sand.u32 %s31, 1
          %s272 = smul.addr %s271, 64
          %s273 = scalar_lea.vmem [#allocation2], %s272
          %s274 = smul.u32 4, %s21
          %s275 = ssub.s32 7, %s274
          %p276 = scmp.lt.s32.totalorder %s275, 4
          %s277 = scalar_select %p276, %s275, 4
          %s278 = smul.u32 128, %s277
          %s279 = smul.u32 %s278, 2
          %s281 = ssub.s32 1024, %s279
          %282 = vsyncadd %s270, %s281
          %p283 = scmp.ne.s32.totalorder 0, %s279
          %s284 = smul.addr %s274, 2
          %s285 = smul.addr %s284, 128
          %s286 = scalar_lea.hbm %s0, %s285
          %s287 = smul.u32 16, %s277
          %s288 = sshll.u32 %s273, 4
          %s289 = int_to_ptr.vmem [resolvable:$true] %s288
          %s290 = sshll.u32 %s287, 4
          %294 = dma.hbm_to_vmem [thread:$0]  (%p283), %s286, %s290, %s289, %s270, 256, 256, 16
        $region44: #{tpu_custom_call.1} parent=39 // pred_fallthru
          _
      $region40: #{tpu_custom_call.1} parent=5 // pred_fallthru
        _
      %p295 = scmp.le.s32.totalorder 1, %s21
      %p296 = scmp.lt.s32.totalorder %s21, 3
      %p297 = pnand %p295, %p296
      %p298 = pneg %p297
      // Predicated region
      $region45: #{tpu_custom_call.1} parent=5 // pred_check
        _
      $region46: #{tpu_custom_call.1} parent=5 // pred_check_branch
        %300 = sbr.rel (%p297) target = $region48
      $region47: #{tpu_custom_call.1} parent=5 // pred_region
        %s301 = ssub.s32 %s21, 1
        %s302 = sand.u32 %s34, 1
        %s303 = scalar_lea.sflag [#allocation3], %s302
        %s304 = sand.u32 %s34, 1
        %s305 = smul.addr %s304, 64
        %s306 = scalar_lea.vmem [#allocation2], %s305
        // Predicated region
        $region49: #{tpu_custom_call.1} parent=47 // pred_check
          %p307 = pneg %p47
        $region50: #{tpu_custom_call.1} parent=47 // pred_check_branch
          %309 = sbr.rel (%p307) target = $region52
        $region51: #{tpu_custom_call.1} parent=47 // pred_region
          %310 = dma.done %s303, 1024
        $region52: #{tpu_custom_call.1} parent=47 // pred_fallthru
          _
        // Predicated region
        $region53: #{tpu_custom_call.1} parent=47 // pred_check
          %p311 = pneg %p68
        $region54: #{tpu_custom_call.1} parent=47 // pred_check_branch
          %313 = sbr.rel (%p311) target = $region56
        $region55: #{tpu_custom_call.1} parent=47 // pred_region
          %314 = dma.done [#allocation6], 2048
        $region56: #{tpu_custom_call.1} parent=47 // pred_fallthru
          _
        // Predicated region
        $region57: #{tpu_custom_call.1} parent=47 // pred_check
          %p315 = pneg %p110
        $region58: #{tpu_custom_call.1} parent=47 // pred_check_branch
          %317 = sbr.rel (%p315) target = $region60
        $region59: #{tpu_custom_call.1} parent=47 // pred_region
          %318 = dma.done [#allocation6], 1024
        $region60: #{tpu_custom_call.1} parent=47 // pred_fallthru
          _
        // Predicated region
        $region61: #{tpu_custom_call.1} parent=47 // pred_check
          %p319 = pneg %p152
        $region62: #{tpu_custom_call.1} parent=47 // pred_check_branch
          %321 = sbr.rel (%p319) target = $region64
        $region63: #{tpu_custom_call.1} parent=47 // pred_region
          %322 = dma.done [#allocation9], 1024
        $region64: #{tpu_custom_call.1} parent=47 // pred_fallthru
          _
        %s323 = sand.u32 %s34, 1
        %s324 = scalar_lea.sflag [#allocation3], %s323
        %s325 = sand.u32 %s34, 1
        %s326 = smul.addr %s325, 64
        %s327 = scalar_lea.vmem [#allocation2], %s326
        %p328 = pneg %p47
        %p329 = pneg %p44
        %p330 = pneg %p68
        %p331 = pneg %p65
        %p332 = pneg %p89
        %p333 = pneg %p86
        %p334 = pneg %p110
        %p335 = pneg %p107
        %p336 = pneg %p131
        %p337 = pneg %p128
        %p338 = pneg %p152
        %p339 = pneg %p149
        %p340 = pneg %p173
        %p341 = pneg %p170
        %p342 = pneg %p199
        %p343 = pneg %p196
        %s344 = sand.u32 %s186, 1
        %s345 = scalar_lea.sflag [#allocation4], %s344
        %s346 = sand.u32 %s186, 1
        %s347 = smul.addr %s346, 32
        %s348 = scalar_lea.vmem [#allocation10], %s347
        %s349 = smul.u32 4, %s26
        %s350 = ssub.s32 7, %s349
        %p351 = scmp.lt.s32.totalorder %s350, 4
        %s352 = scalar_select %p351, %s350, 4
        %s353 = smul.u32 128, %s352
        %s354 = smul.u32 %s353, 2
        %s355 = smul.u32 4, %s26
        %s356 = ssub.s32 7, %s355
        %p357 = scmp.lt.s32.totalorder %s356, 4
        %s358 = scalar_select %p357, %s356, 4
        %s359 = smul.u32 128, %s358
        %v361 = vld [vmem:[%s306] sm:$0xff]
        %v362 = vld [vmem:[%s306 + $0x8] sm:$0xff]
        %v363 = vld [vmem:[%s306 + $0x10] sm:$0xff]
        %v364 = vld [vmem:[%s306 + $0x18] sm:$0xff]
        %v365 = vld [vmem:[%s306 + $0x20] sm:$0xff]
        %v366 = vld [vmem:[%s306 + $0x28] sm:$0xff]
        %v367 = vld [vmem:[%s306 + $0x30] sm:$0xff]
        %v368 = vld [vmem:[%s306 + $0x38] sm:$0xff]
        %v369 = vpack.c.bf16 %v363, %v361
        %v370 = vpack.c.bf16 %v364, %v362
        %v371 = vpack.c.bf16 %v367, %v365
        %v372 = vpack.c.bf16 %v368, %v366
        %v373 = vld [vmem:[#allocation5] sm:$0xf]
        %v374 = vld [vmem:[#allocation5 + $0x4] sm:$0xf]
        %v375 = vld [vmem:[#allocation5 + $0x8] sm:$0xf]
        %v376 = vld [vmem:[#allocation5 + $0xc] sm:$0xf]
        %v377 = vld [vmem:[#allocation5 + $0x10] sm:$0xf]
        %v378 = vld [vmem:[#allocation5 + $0x14] sm:$0xf]
        %v379 = vld [vmem:[#allocation5 + $0x18] sm:$0xf]
        %v380 = vld [vmem:[#allocation5 + $0x1c] sm:$0xf]
        %v381 = vld [vmem:[#allocation5 + $0x20] sm:$0xf]
        %v382 = vld [vmem:[#allocation5 + $0x24] sm:$0xf]
        %v383 = vld [vmem:[#allocation5 + $0x28] sm:$0xf]
        %v384 = vld [vmem:[#allocation5 + $0x2c] sm:$0xf]
        %v385 = vld [vmem:[#allocation5 + $0x30] sm:$0xf]
        %v386 = vld [vmem:[#allocation5 + $0x34] sm:$0xf]
        %v387 = vld [vmem:[#allocation5 + $0x38] sm:$0xf]
        %v388 = vld [vmem:[#allocation5 + $0x3c] sm:$0xf]
        %v389 = vld [vmem:[#allocation5 + $0x40] sm:$0xf]
        %v390 = vld [vmem:[#allocation5 + $0x44] sm:$0xf]
        %v391 = vld [vmem:[#allocation5 + $0x48] sm:$0xf]
        %v392 = vld [vmem:[#allocation5 + $0x4c] sm:$0xf]
        %v393 = vld [vmem:[#allocation5 + $0x50] sm:$0xf]
        %v394 = vld [vmem:[#allocation5 + $0x54] sm:$0xf]
        %v395 = vld [vmem:[#allocation5 + $0x58] sm:$0xf]
        %v396 = vld [vmem:[#allocation5 + $0x5c] sm:$0xf]
        %v397 = vld [vmem:[#allocation5 + $0x60] sm:$0xf]
        %v398 = vld [vmem:[#allocation5 + $0x64] sm:$0xf]
        %v399 = vld [vmem:[#allocation5 + $0x68] sm:$0xf]
        %v400 = vld [vmem:[#allocation5 + $0x6c] sm:$0xf]
        %v401 = vld [vmem:[#allocation5 + $0x70] sm:$0xf]
        %v402 = vld [vmem:[#allocation5 + $0x74] sm:$0xf]
        %v403 = vld [vmem:[#allocation5 + $0x78] sm:$0xf]
        %v404 = vld [vmem:[#allocation5 + $0x7c] sm:$0xf]
        %v405 = vld [vmem:[%s2] sm:$0x1]
        %v407 = vlaneseq
        %v408 = vshrl.u32 %v407, 7
        %v409 = vsub.s32 0, %v408
        %v410 = vrot.slane %v405, %v409
        %v444 = vunpack.c.l.b16 %v373
        %v445 = vunpack.c.l.b16 %v374
        %v446 = vunpack.c.l.b16 %v375
        %v447 = vunpack.c.l.b16 %v376
        %v448 = vunpack.c.l.b16 %v377
        %v449 = vunpack.c.l.b16 %v378
        %v450 = vunpack.c.l.b16 %v379
        %v451 = vunpack.c.l.b16 %v380
        %v452 = vunpack.c.l.b16 %v381
        %v453 = vunpack.c.l.b16 %v382
        %v454 = vunpack.c.l.b16 %v383
        %v455 = vunpack.c.l.b16 %v384
        %v456 = vunpack.c.l.b16 %v385
        %v457 = vunpack.c.l.b16 %v386
        %v458 = vunpack.c.l.b16 %v387
        %v459 = vunpack.c.l.b16 %v388
        %v460 = vunpack.c.l.b16 %v389
        %v461 = vunpack.c.l.b16 %v390
        %v462 = vunpack.c.l.b16 %v391
        %v463 = vunpack.c.l.b16 %v392
        %v464 = vunpack.c.l.b16 %v393
        %v465 = vunpack.c.l.b16 %v394
        %v466 = vunpack.c.l.b16 %v395
        %v467 = vunpack.c.l.b16 %v396
        %v468 = vunpack.c.l.b16 %v397
        %v469 = vunpack.c.l.b16 %v398
        %v470 = vunpack.c.l.b16 %v399
        %v471 = vunpack.c.l.b16 %v400
        %v472 = vunpack.c.l.b16 %v401
        %v473 = vunpack.c.l.b16 %v402
        %v474 = vunpack.c.l.b16 %v403
        %v475 = vunpack.c.l.b16 %v404
        %v476 = vpack.c.b16 %v445, %v444
        %v477 = vpack.c.b16 %v447, %v446
        %v478 = vpack.c.b16 %v449, %v448
        %v479 = vpack.c.b16 %v451, %v450
        %v480 = vpack.c.b16 %v453, %v452
        %v481 = vpack.c.b16 %v455, %v454
        %v482 = vpack.c.b16 %v457, %v456
        %v483 = vpack.c.b16 %v459, %v458
        %v484 = vpack.c.b16 %v461, %v460
        %v485 = vpack.c.b16 %v463, %v462
        %v486 = vpack.c.b16 %v465, %v464
        %v487 = vpack.c.b16 %v467, %v466
        %v488 = vpack.c.b16 %v469, %v468
        %v489 = vpack.c.b16 %v471, %v470
        %v490 = vpack.c.b16 %v473, %v472
        %v491 = vpack.c.b16 %v475, %v474
        %508 = vmatprep.subr.bf16.mxu0 0
        %509 = vmatpush1.bf16.msra.mxu0 %v483
        %510 = vmatprep.subr.bf16.mxu0 0
        %511 = vmatpush1.bf16.msra.mxu0 %v482
        %512 = vmatprep.subr.bf16.mxu0 0
        %513 = vmatpush1.bf16.msra.mxu0 %v481
        %514 = vmatprep.subr.bf16.mxu0 0
        %515 = vmatpush1.bf16.msra.mxu0 %v480
        %516 = vmatprep.subr.bf16.mxu0 0
        %517 = vmatpush1.bf16.msra.mxu0 %v479
        %518 = vmatprep.subr.bf16.mxu0 0
        %519 = vmatpush1.bf16.msra.mxu0 %v478
        %520 = vmatprep.subr.bf16.mxu0 0
        %521 = vmatpush1.bf16.msra.mxu0 %v477
        %522 = vmatprep.subr.bf16.mxu0 0
        %523 = vmatpush1.bf16.msra.mxu0 %v476
        %524 = vmatprep.subr.bf16.mxu0 0
        %525 = vmatpush2.bf16.msra.mxu0 %v491
        %526 = vmatprep.subr.bf16.mxu0 0
        %527 = vmatpush2.bf16.msra.mxu0 %v490
        %528 = vmatprep.subr.bf16.mxu0 0
        %529 = vmatpush2.bf16.msra.mxu0 %v489
        %530 = vmatprep.subr.bf16.mxu0 0
        %531 = vmatpush2.bf16.msra.mxu0 %v488
        %532 = vmatprep.subr.bf16.mxu0 0
        %533 = vmatpush2.bf16.msra.mxu0 %v487
        %534 = vmatprep.subr.bf16.mxu0 0
        %535 = vmatpush2.bf16.msra.mxu0 %v486
        %536 = vmatprep.subr.bf16.mxu0 0
        %537 = vmatpush2.bf16.msra.mxu0 %v485
        %538 = vmatprep.subr.bf16.mxu0 0
        %539 = vmatpush2.bf16.msra.mxu0 %v484
        %540 = vmatprep.mubr.bf16.mxu0 %v370
        %541 = vmatmul.mubr.bf16.gmra.mxu0 %v369
        %v542 = vpop.f32.mrf.mxu0
        %v543 = vadd.f32 %v410, %v542
        %v544 = vpop.f32.mrf.mxu0
        %v545 = vpop.f32.mrf.mxu0
        %v546 = vadd.f32 %v410, %v545
        %v547 = vpop.f32.mrf.mxu0
        %548 = vmatprep.mubr.bf16.mxu0 %v372
        %549 = vmatmul.mubr.bf16.gmra.mxu0 %v371
        %v550 = vpop.f32.mrf.mxu0
        %v551 = vadd.f32 %v410, %v550
        %v552 = vpop.f32.mrf.mxu0
        %v553 = vpop.f32.mrf.mxu0
        %v554 = vadd.f32 %v410, %v553
        %v555 = vpop.f32.mrf.mxu0
        %556 = vdwg.mxu0
        %v557 = vmax.f32 %v543, 0.0
        %v558 = vmax.f32 %v546, 0.0
        %v559 = vmax.f32 %v551, 0.0
        %v560 = vmax.f32 %v554, 0.0
        %v561 = vpack.c.bf16 %v558, %v557
        %v562 = vpack.c.bf16 %v560, %v559
        %v563 = vld [vmem:[#allocation7] sm:$0xf]
        %v564 = vld [vmem:[#allocation7 + $0x4] sm:$0xf]
        %v565 = vld [vmem:[#allocation7 + $0x8] sm:$0xf]
        %v566 = vld [vmem:[#allocation7 + $0xc] sm:$0xf]
        %v567 = vld [vmem:[#allocation7 + $0x10] sm:$0xf]
        %v568 = vld [vmem:[#allocation7 + $0x14] sm:$0xf]
        %v569 = vld [vmem:[#allocation7 + $0x18] sm:$0xf]
        %v570 = vld [vmem:[#allocation7 + $0x1c] sm:$0xf]
        %v571 = vld [vmem:[#allocation7 + $0x20] sm:$0xf]
        %v572 = vld [vmem:[#allocation7 + $0x24] sm:$0xf]
        %v573 = vld [vmem:[#allocation7 + $0x28] sm:$0xf]
        %v574 = vld [vmem:[#allocation7 + $0x2c] sm:$0xf]
        %v575 = vld [vmem:[#allocation7 + $0x30] sm:$0xf]
        %v576 = vld [vmem:[#allocation7 + $0x34] sm:$0xf]
        %v577 = vld [vmem:[#allocation7 + $0x38] sm:$0xf]
        %v578 = vld [vmem:[#allocation7 + $0x3c] sm:$0xf]
        %v579 = vld [vmem:[%s4] sm:$0x1]
        %v581 = vlaneseq
        %v582 = vshrl.u32 %v581, 7
        %v583 = vsub.s32 0, %v582
        %v584 = vrot.slane %v579, %v583
        %v602 = vunpack.c.l.b16 %v563
        %v603 = vunpack.c.l.b16 %v564
        %v604 = vunpack.c.l.b16 %v565
        %v605 = vunpack.c.l.b16 %v566
        %v606 = vunpack.c.l.b16 %v567
        %v607 = vunpack.c.l.b16 %v568
        %v608 = vunpack.c.l.b16 %v569
        %v609 = vunpack.c.l.b16 %v570
        %v610 = vunpack.c.l.b16 %v571
        %v611 = vunpack.c.l.b16 %v572
        %v612 = vunpack.c.l.b16 %v573
        %v613 = vunpack.c.l.b16 %v574
        %v614 = vunpack.c.l.b16 %v575
        %v615 = vunpack.c.l.b16 %v576
        %v616 = vunpack.c.l.b16 %v577
        %v617 = vunpack.c.l.b16 %v578
        %v618 = vpack.c.b16 %v603, %v602
        %v619 = vpack.c.b16 %v605, %v604
        %v620 = vpack.c.b16 %v607, %v606
        %v621 = vpack.c.b16 %v609, %v608
        %v622 = vpack.c.b16 %v611, %v610
        %v623 = vpack.c.b16 %v613, %v612
        %v624 = vpack.c.b16 %v615, %v614
        %v625 = vpack.c.b16 %v617, %v616
        %634 = vmatprep.subr.bf16.mxu0 0
        %635 = vmatpush1.bf16.msra.mxu0 %v625
        %636 = vmatprep.subr.bf16.mxu0 0
        %637 = vmatpush1.bf16.msra.mxu0 %v624
        %638 = vmatprep.subr.bf16.mxu0 0
        %639 = vmatpush1.bf16.msra.mxu0 %v623
        %640 = vmatprep.subr.bf16.mxu0 0
        %641 = vmatpush1.bf16.msra.mxu0 %v622
        %642 = vmatprep.subr.bf16.mxu0 0
        %643 = vmatpush1.bf16.msra.mxu0 %v621
        %644 = vmatprep.subr.bf16.mxu0 0
        %645 = vmatpush1.bf16.msra.mxu0 %v620
        %646 = vmatprep.subr.bf16.mxu0 0
        %647 = vmatpush1.bf16.msra.mxu0 %v619
        %648 = vmatprep.subr.bf16.mxu0 0
        %649 = vmatpush1.bf16.msra.mxu0 %v618
        %650 = vmatprep.subr.bf16.mxu0 0
        %651 = vmatpush2.bf16.msra.mxu0 0
        %652 = vmatprep.subr.bf16.mxu0 0
        %653 = vmatpush2.bf16.msra.mxu0 0
        %654 = vmatprep.subr.bf16.mxu0 0
        %655 = vmatpush2.bf16.msra.mxu0 0
        %656 = vmatprep.subr.bf16.mxu0 0
        %657 = vmatpush2.bf16.msra.mxu0 0
        %658 = vmatprep.subr.bf16.mxu0 0
        %659 = vmatpush2.bf16.msra.mxu0 0
        %660 = vmatprep.subr.bf16.mxu0 0
        %661 = vmatpush2.bf16.msra.mxu0 0
        %662 = vmatprep.subr.bf16.mxu0 0
        %663 = vmatpush2.bf16.msra.mxu0 0
        %664 = vmatprep.subr.bf16.mxu0 0
        %665 = vmatpush2.bf16.msra.mxu0 0
        %666 = vmatprep.mubr.bf16.mxu0 0
        %667 = vmatmul.mubr.bf16.gmra.mxu0 %v561
        %v668 = vpop.f32.mrf.mxu0
        %v669 = vadd.f32 %v584, %v668
        %v670 = vpop.f32.mrf.mxu0
        %v671 = vpop.f32.mrf.mxu0
        %v672 = vadd.f32 %v584, %v671
        %v673 = vpop.f32.mrf.mxu0
        %674 = vmatprep.mubr.bf16.mxu0 0
        %675 = vmatmul.mubr.bf16.gmra.mxu0 %v562
        %v676 = vpop.f32.mrf.mxu0
        %v677 = vadd.f32 %v584, %v676
        %v678 = vpop.f32.mrf.mxu0
        %v679 = vpop.f32.mrf.mxu0
        %v680 = vadd.f32 %v584, %v679
        %v681 = vpop.f32.mrf.mxu0
        %682 = vdwg.mxu0
        %v683 = vmax.f32 %v669, 0.0
        %v684 = vmax.f32 %v672, 0.0
        %v685 = vmax.f32 %v677, 0.0
        %v686 = vmax.f32 %v680, 0.0
        %v687 = vpack.c.bf16 %v684, %v683
        %v688 = vpack.c.bf16 %v686, %v685
        %v689 = vld [vmem:[#allocation8] sm:$0xf]
        %v690 = vld [vmem:[#allocation8 + $0x4] sm:$0xf]
        %v691 = vld [vmem:[#allocation8 + $0x8] sm:$0xf]
        %v692 = vld [vmem:[#allocation8 + $0xc] sm:$0xf]
        %v693 = vld [vmem:[#allocation8 + $0x10] sm:$0xf]
        %v694 = vld [vmem:[#allocation8 + $0x14] sm:$0xf]
        %v695 = vld [vmem:[#allocation8 + $0x18] sm:$0xf]
        %v696 = vld [vmem:[#allocation8 + $0x1c] sm:$0xf]
        %v697 = vld [vmem:[#allocation8 + $0x20] sm:$0xf]
        %v698 = vld [vmem:[#allocation8 + $0x24] sm:$0xf]
        %v699 = vld [vmem:[#allocation8 + $0x28] sm:$0xf]
        %v700 = vld [vmem:[#allocation8 + $0x2c] sm:$0xf]
        %v701 = vld [vmem:[#allocation8 + $0x30] sm:$0xf]
        %v702 = vld [vmem:[#allocation8 + $0x34] sm:$0xf]
        %v703 = vld [vmem:[#allocation8 + $0x38] sm:$0xf]
        %v704 = vld [vmem:[#allocation8 + $0x3c] sm:$0xf]
        %v705 = vld [vmem:[%s6] sm:$0x1]
        %v707 = vlaneseq
        %v708 = vshrl.u32 %v707, 7
        %v709 = vsub.s32 0, %v708
        %v710 = vrot.slane %v705, %v709
        %v728 = vunpack.c.l.b16 %v689
        %v729 = vunpack.c.l.b16 %v690
        %v730 = vunpack.c.l.b16 %v691
        %v731 = vunpack.c.l.b16 %v692
        %v732 = vunpack.c.l.b16 %v693
        %v733 = vunpack.c.l.b16 %v694
        %v734 = vunpack.c.l.b16 %v695
        %v735 = vunpack.c.l.b16 %v696
        %v736 = vunpack.c.l.b16 %v697
        %v737 = vunpack.c.l.b16 %v698
        %v738 = vunpack.c.l.b16 %v699
        %v739 = vunpack.c.l.b16 %v700
        %v740 = vunpack.c.l.b16 %v701
        %v741 = vunpack.c.l.b16 %v702
        %v742 = vunpack.c.l.b16 %v703
        %v743 = vunpack.c.l.b16 %v704
        %v744 = vpack.c.b16 %v729, %v728
        %v745 = vpack.c.b16 %v731, %v730
        %v746 = vpack.c.b16 %v733, %v732
        %v747 = vpack.c.b16 %v735, %v734
        %v748 = vpack.c.b16 %v737, %v736
        %v749 = vpack.c.b16 %v739, %v738
        %v750 = vpack.c.b16 %v741, %v740
        %v751 = vpack.c.b16 %v743, %v742
        %760 = vmatprep.subr.bf16.mxu0 0
        %761 = vmatpush1.bf16.msra.mxu0 %v751
        %762 = vmatprep.subr.bf16.mxu0 0
        %763 = vmatpush1.bf16.msra.mxu0 %v750
        %764 = vmatprep.subr.bf16.mxu0 0
        %765 = vmatpush1.bf16.msra.mxu0 %v749
        %766 = vmatprep.subr.bf16.mxu0 0
        %767 = vmatpush1.bf16.msra.mxu0 %v748
        %768 = vmatprep.subr.bf16.mxu0 0
        %769 = vmatpush1.bf16.msra.mxu0 %v747
        %770 = vmatprep.subr.bf16.mxu0 0
        %771 = vmatpush1.bf16.msra.mxu0 %v746
        %772 = vmatprep.subr.bf16.mxu0 0
        %773 = vmatpush1.bf16.msra.mxu0 %v745
        %774 = vmatprep.subr.bf16.mxu0 0
        %775 = vmatpush1.bf16.msra.mxu0 %v744
        %776 = vmatprep.subr.bf16.mxu0 0
        %777 = vmatpush2.bf16.msra.mxu0 0
        %778 = vmatprep.subr.bf16.mxu0 0
        %779 = vmatpush2.bf16.msra.mxu0 0
        %780 = vmatprep.subr.bf16.mxu0 0
        %781 = vmatpush2.bf16.msra.mxu0 0
        %782 = vmatprep.subr.bf16.mxu0 0
        %783 = vmatpush2.bf16.msra.mxu0 0
        %784 = vmatprep.subr.bf16.mxu0 0
        %785 = vmatpush2.bf16.msra.mxu0 0
        %786 = vmatprep.subr.bf16.mxu0 0
        %787 = vmatpush2.bf16.msra.mxu0 0
        %788 = vmatprep.subr.bf16.mxu0 0
        %789 = vmatpush2.bf16.msra.mxu0 0
        %790 = vmatprep.subr.bf16.mxu0 0
        %791 = vmatpush2.bf16.msra.mxu0 0
        %792 = vmatprep.mubr.bf16.mxu0 0
        %793 = vmatmul.mubr.bf16.gmra.mxu0 %v687
        %v794 = vpop.f32.mrf.mxu0
        %v795 = vadd.f32 %v710, %v794
        %v796 = vpop.f32.mrf.mxu0
        %v797 = vpop.f32.mrf.mxu0
        %v798 = vadd.f32 %v710, %v797
        %v799 = vpop.f32.mrf.mxu0
        %800 = vmatprep.mubr.bf16.mxu0 0
        %801 = vmatmul.mubr.bf16.gmra.mxu0 %v688
        %v802 = vpop.f32.mrf.mxu0
        %v803 = vadd.f32 %v710, %v802
        %v804 = vpop.f32.mrf.mxu0
        %v805 = vpop.f32.mrf.mxu0
        %v806 = vadd.f32 %v710, %v805
        %v807 = vpop.f32.mrf.mxu0
        %808 = vdwg.mxu0
        %809 = vst [vmem:[%s348] sm:$0xff] %v795
        %810 = vst [vmem:[%s348 + $0x8] sm:$0xff] %v798
        %811 = vst [vmem:[%s348 + $0x10] sm:$0xff] %v803
        %812 = vst [vmem:[%s348 + $0x18] sm:$0xff] %v806
        %s813 = sand.u32 %s186, 1
        %s814 = scalar_lea.sflag [#allocation4], %s813
        %s815 = sand.u32 %s186, 1
        %s816 = smul.addr %s815, 32
        %s817 = scalar_lea.vmem [#allocation10], %s816
        // Predicated region
        $region65: #{tpu_custom_call.1} parent=47 // pred_check
          %p818 = pneg %p196
        $region66: #{tpu_custom_call.1} parent=47 // pred_check_branch
          %820 = sbr.rel (%p818) target = $region68
        $region67: #{tpu_custom_call.1} parent=47 // pred_region
          %s821 = smul.u32 4, %s26
          %s822 = ssub.s32 7, %s821
          %p823 = scmp.lt.s32.totalorder %s822, 4
          %s824 = scalar_select %p823, %s822, 4
          %s825 = smul.u32 128, %s824
          %s827 = ssub.s32 512, %s825
          %828 = vsyncadd %s814, %s827
          %p829 = scmp.ne.s32.totalorder 0, %s825
          %s830 = smul.addr %s821, 128
          %s831 = scalar_lea.hbm %s7, %s830
          %s832 = smul.u32 8, %s824
          %s833 = sshll.u32 %s817, 4
          %s834 = int_to_ptr.vmem [resolvable:$true] %s833
          %s835 = sshll.u32 %s832, 4
          %839 = dma.vmem_to_hbm [thread:$0]  (%p829), %s834, %s835, %s831, %s814, 128, 128, 8
        $region68: #{tpu_custom_call.1} parent=47 // pred_fallthru
          _
      $region48: #{tpu_custom_call.1} parent=5 // pred_fallthru
        _
      %p840 = scmp.le.s32.totalorder 2, %s21
      // Predicated region
      $region69: #{tpu_custom_call.1} parent=5 // pred_check
        %p841 = pneg %p840
      $region70: #{tpu_custom_call.1} parent=5 // pred_check_branch
        %843 = sbr.rel (%p841) target = $region72
      $region71: #{tpu_custom_call.1} parent=5 // pred_region
        %s844 = ssub.s32 %s21, 2
        // Predicated region
        $region73: #{tpu_custom_call.1} parent=71 // pred_check
          %p845 = pneg %p202
        $region74: #{tpu_custom_call.1} parent=71 // pred_check_branch
          %847 = sbr.rel (%p845) target = $region76
        $region75: #{tpu_custom_call.1} parent=71 // pred_region
          %s848 = sand.u32 %s187, 1
          %s849 = scalar_lea.sflag [#allocation4], %s848
          %s850 = sand.u32 %s187, 1
          %s851 = smul.addr %s850, 32
          %s852 = scalar_lea.vmem [#allocation10], %s851
          %853 = dma.done %s849, 512
        $region76: #{tpu_custom_call.1} parent=71 // pred_fallthru
          _
      $region72: #{tpu_custom_call.1} parent=5 // pred_fallthru
        _
    $region6: #{tpu_custom_call.1} parent=1 // loop_footer
      %s25 = sadd.s32 1, %s21
    $region7: #{tpu_custom_call.1} parent=1 // loop_footer_branch
      %20 = sbr.rel target = $region3
    $region8: #{tpu_custom_call.1} parent=1 // loop_exit
      _
    %854 = vsyncpa [#allocation3], 1
    %s855 = scalar_lea.sflag [#allocation3], 1
    %856 = vsyncpa %s855, 1
    %857 = vsyncpa [#allocation6], 1
    %858 = vsyncpa [#allocation9], 1
    %859 = vsyncpa [#allocation4], 1
    %s860 = scalar_lea.sflag [#allocation4], 1
    %861 = vsyncpa %s860, 1

</llo_original>
